<compile_context>
chip_gen: v5e
topology: v5e:2x2
jax: 0.10.0
libtpu: 0.0.40
codegen_flags: <defaults>
</compile_context>

<pallas_src>
import functools

import jax
import jax.numpy as jnp
from jax.experimental import pallas as pl
from jax.experimental.pallas import tpu as pltpu

_EPS = 1e-12  # F.normalize default eps


def _round_up(x, m):
    return ((x + m - 1) // m) * m


def _vmem_budget():
    """(usable_limit, physical_capacity) — ~65% of VMEM, generation-aware."""
    cap = 64 << 20
    try:
        cap = int(getattr(pltpu.get_tpu_info(), "vmem_capacity_bytes", cap))
    except Exception:
        pass
    return int(cap * 0.65), cap


# --------------------------------------------------------------------------
# prepass: row-wise L2 normalization, emitted in bf16 (for streamed keys)
# --------------------------------------------------------------------------
def _l2_normalize_kernel(x_ref, o_ref):
    x = x_ref[...]
    # 1 / max(||x||, eps)  ==  rsqrt(max(sumsq, eps^2))  (EUP rsqrt, f32)
    inv_norm = jax.lax.rsqrt(
        jnp.maximum(jnp.sum(x * x, axis=-1, keepdims=True), _EPS * _EPS))
    o_ref[...] = (x * inv_norm).astype(o_ref.dtype)


def _l2_normalize_bf16(x_pad, tile_rows, vmem_limit):
    r_pad, d_pad = x_pad.shape
    return pl.pallas_call(
        _l2_normalize_kernel,
        out_shape=jax.ShapeDtypeStruct((r_pad, d_pad), jnp.bfloat16),
        grid=(r_pad // tile_rows,),
        in_specs=[pl.BlockSpec((tile_rows, d_pad), lambda i: (i, 0))],
        out_specs=pl.BlockSpec((tile_rows, d_pad), lambda i: (i, 0)),
        compiler_params=pltpu.CompilerParams(
            dimension_semantics=("parallel",),
            vmem_limit_bytes=vmem_limit),
    )(x_pad)


# --------------------------------------------------------------------------
# unpaired negatives:  logits = [ <q, p> | q @ nk^T ] / T, target = col 0
#   q_ref, p_ref : raw f32 row tiles (normalized in-kernel at ki==0)
#   nk_ref       : pre-normalized bf16 negative-key tile (streamed)
# --------------------------------------------------------------------------
def _infonce_unpaired_kernel(q_ref, p_ref, nk_ref, loss_ref,
                             q_sc, m_sc, s_sc, pos_sc,
                             *, inv_t, num_pad_cols):
    ki = pl.program_id(1)

    @pl.when(ki == 0)
    def _init():
        q = q_ref[...]
        q_n = q * (jax.lax.rsqrt(jnp.maximum(
            jnp.sum(q * q, axis=-1, keepdims=True), _EPS * _EPS)) * inv_t)
        p = p_ref[...]
        p_n = p * jax.lax.rsqrt(jnp.maximum(
            jnp.sum(p * p, axis=-1, keepdims=True), _EPS * _EPS))
        pos = jnp.sum(q_n * p_n, axis=-1, keepdims=True)     # already / T
        q_sc[...] = q_n.astype(jnp.bfloat16)                 # bf16, 1/T folded
        pos_sc[...] = pos
        m_sc[...] = pos                    # running max starts at the positive
        s_sc[...] = jnp.ones_like(pos)     # exp(pos - pos) = 1

    # (tn, tm) negative logits; (1,1) contraction feeds the MXU without a .T
    neg = jax.lax.dot_general(
        q_sc[...], nk_ref[...],
        dimension_numbers=(((1,), (1,)), ((), ())),
        preferred_element_type=jnp.float32)

    m_prev = m_sc[...]
    m_new = jnp.maximum(m_prev, jnp.max(neg, axis=-1, keepdims=True))
    s_sc[...] = s_sc[...] * jnp.exp(m_prev - m_new) + jnp.sum(
        jnp.exp(neg - m_new), axis=-1, keepdims=True)
    m_sc[...] = m_new

    @pl.when(ki == pl.num_programs(1) - 1)
    def _finalize():
        s = s_sc[...]
        if num_pad_cols:  # static; padded key rows are exact zeros -> logit 0
            s = jnp.maximum(s - num_pad_cols * jnp.exp(-m_sc[...]),
                            jnp.exp(pos_sc[...] - m_sc[...]))
        loss_ref[...] = m_sc[...] + jnp.log(s) - pos_sc[...]


# --------------------------------------------------------------------------
# in-batch negatives:  logits = q @ p^T / T, labels = arange(N)
#   q_ref     : raw f32 row tile (normalized in-kernel at kj==0)
#   p_pos_ref : pre-normalized bf16 positive row tile (for the diagonal logit)
#   p_key_ref : pre-normalized bf16 key tile (streamed)
# --------------------------------------------------------------------------
def _infonce_self_kernel(q_ref, p_pos_ref, p_key_ref, loss_ref,
                         q_sc, m_sc, s_sc, pos_sc,
                         *, inv_t, num_pad_cols):
    kj = pl.program_id(1)

    @pl.when(kj == 0)
    def _init():
        q = q_ref[...]
        q_n = q * (jax.lax.rsqrt(jnp.maximum(
            jnp.sum(q * q, axis=-1, keepdims=True), _EPS * _EPS)) * inv_t)
        q_sc[...] = q_n.astype(jnp.bfloat16)
        pos = jnp.sum(q_n * p_pos_ref[...].astype(jnp.float32),
                      axis=-1, keepdims=True)                 # already / T
        pos_sc[...] = pos
        m_sc[...] = jnp.full_like(pos, -jnp.inf)
        s_sc[...] = jnp.zeros_like(pos)

    logits = jax.lax.dot_general(
        q_sc[...], p_key_ref[...],
        dimension_numbers=(((1,), (1,)), ((), ())),
        preferred_element_type=jnp.float32)

    m_prev = m_sc[...]
    m_new = jnp.maximum(m_prev, jnp.max(logits, axis=-1, keepdims=True))
    s_sc[...] = s_sc[...] * jnp.exp(m_prev - m_new) + jnp.sum(
        jnp.exp(logits - m_new), axis=-1, keepdims=True)
    m_sc[...] = m_new

    @pl.when(kj == pl.num_programs(1) - 1)
    def _finalize():
        s = s_sc[...]
        if num_pad_cols:  # static; padded key rows are exact zeros -> logit 0
            s = jnp.maximum(s - num_pad_cols * jnp.exp(-m_sc[...]),
                            jnp.exp(pos_sc[...] - m_sc[...]))
        loss_ref[...] = m_sc[...] + jnp.log(s) - pos_sc[...]


# --------------------------------------------------------------------------
# module wrapper
# --------------------------------------------------------------------------
class InfoNCE:
    """Pallas port of the PyTorch InfoNCE module."""

    def __init__(self, temperature=0.1, reduction="mean", negative_mode="unpaired"):
        if reduction not in ("none", "sum", "mean"):
            raise ValueError("reduction must be one of ['none', 'sum', 'mean']")
        if negative_mode not in ("unpaired", "paired"):
            raise ValueError("negative_mode must be 'unpaired' or 'paired'")
        if negative_mode == "paired":
            # TODO(synk): negative_mode='paired' (batched (N, M, D) negatives) not implemented.
            raise NotImplementedError("only negative_mode='unpaired' implemented")
        self.temperature = float(temperature)
        self.reduction = reduction

    def __call__(self, query, positive_key, negative_keys=None):
        if query.ndim != 2 or positive_key.ndim != 2:
            raise ValueError("query / positive_key must be 2-D")
        if query.shape[0] != positive_key.shape[0]:
            raise ValueError("query and positive_key must have the same number of samples")
        if query.shape[-1] != positive_key.shape[-1]:
            raise ValueError("query and positive_key must have the same feature size")

        n, d = query.shape
        d_pad = _round_up(d, 128)
        vmem_limit, vmem_cap = _vmem_budget()
        # 128 MiB parts (v5e/v6e) -> bigger row tile for arithmetic intensity;
        # 64 MiB parts (v7x) -> 512 is already past the per-core roofline.
        tn_target = 768 if vmem_cap > (96 << 20) else 512
        inv_t = 1.0 / self.temperature

        def pad_to(x, rows):
            r, dd = x.shape
            return jnp.pad(x.astype(jnp.float32),
                           ((0, rows - r), (0, d_pad - dd)))

        def c_params():
            return pltpu.CompilerParams(
                dimension_semantics=("parallel", "arbitrary"),
                vmem_limit_bytes=vmem_limit)

        if negative_keys is not None:
            if negative_keys.ndim != 2:
                raise ValueError("negative_keys must be 2-D for negative_mode='unpaired'")
            if negative_keys.shape[-1] != d:
                raise ValueError("query and negative_keys must have the same feature size")
            m = negative_keys.shape[0]

            # row tile (multiple of 16 for bf16 sublane packing); keep >=2 row
            # tiles for big problems so the 'parallel' axis feeds both v7x TCs.
            tn = min(tn_target, _round_up(n, 16))
            if n >= 256:
                tn = min(tn, max(_round_up(-(-n // 2), 16), 128))
            tm = min(512, _round_up(m, 128))          # lane / MXU-output width
            # clamp to VMEM budget (q f32 + p f32 dbl-buf, q_sc bf16, nk bf16 dbl-buf)
            while d_pad * (18 * tn + 4 * tm) > vmem_limit and tn > 16:
                tn = max(16, ((tn // 2) // 16) * 16)
            while d_pad * (18 * tn + 4 * tm) > vmem_limit and tm > 128:
                tm = max(128, ((tm // 2) // 128) * 128)

            n_pad = _round_up(n, tn)
            m_pad = _round_up(m, tm)

            q_pad = pad_to(query, n_pad)
            p_pad = pad_to(positive_key, n_pad)

            # prepass only for the re-streamed negative keys: normalize + bf16
            tile_rows = tm
            while tile_rows % 32 == 0 and tile_rows * d_pad * 12 > vmem_limit // 2:
                tile_rows //= 2
            nk_n = _l2_normalize_bf16(pad_to(negative_keys, m_pad), tile_rows,
                                      vmem_limit)

            kernel = functools.partial(
                _infonce_unpaired_kernel,
                inv_t=inv_t, num_pad_cols=m_pad - m)

            per_sample = pl.pallas_call(
                kernel,
                out_shape=jax.ShapeDtypeStruct((n_pad, 1), jnp.float32),
                grid=(n_pad // tn, m_pad // tm),
                in_specs=[
                    pl.BlockSpec((tn, d_pad), lambda i, k: (i, 0)),   # raw query rows
                    pl.BlockSpec((tn, d_pad), lambda i, k: (i, 0)),   # raw positive rows
                    pl.BlockSpec((tm, d_pad), lambda i, k: (k, 0)),   # bf16 negatives (streamed)
                ],
                out_specs=pl.BlockSpec((tn, 1), lambda i, k: (i, 0)),
                scratch_shapes=[pltpu.VMEM((tn, d_pad), jnp.bfloat16),  # normalized q (1/T folded)
                                pltpu.VMEM((tn, 1), jnp.float32),       # running max
                                pltpu.VMEM((tn, 1), jnp.float32),       # running sum-exp
                                pltpu.VMEM((tn, 1), jnp.float32)],      # positive logit
                compiler_params=c_params(),
                cost_estimate=pl.CostEstimate(
                    flops=2 * n_pad * m_pad * d_pad,
                    transcendentals=n_pad * m_pad,
                    bytes_accessed=(8 * n_pad * d_pad
                                    + 2 * (n_pad // tn) * m_pad * d_pad
                                    + 4 * n_pad)),
            )(q_pad, p_pad, nk_n)
        else:
            # in-batch negatives: positive_key doubles as the streamed key set.
            t = min((tn_target // 128) * 128, max(_round_up(n, 128), 128))
            if n >= 256:
                t = min(t, max(_round_up(-(-n // 2), 128), 128))
            while d_pad * 18 * t > vmem_limit and t > 128:
                t = max(128, ((t // 2) // 128) * 128)
            n_pad = _round_up(n, t)

            q_pad = pad_to(query, n_pad)

            tile_rows = t
            while tile_rows % 32 == 0 and tile_rows * d_pad * 12 > vmem_limit // 2:
                tile_rows //= 2
            p_n = _l2_normalize_bf16(pad_to(positive_key, n_pad), tile_rows,
                                     vmem_limit)

            kernel = functools.partial(
                _infonce_self_kernel,
                inv_t=inv_t, num_pad_cols=n_pad - n)

            per_sample = pl.pallas_call(
                kernel,
                out_shape=jax.ShapeDtypeStruct((n_pad, 1), jnp.float32),
                grid=(n_pad // t, n_pad // t),
                in_specs=[
                    pl.BlockSpec((t, d_pad), lambda i, k: (i, 0)),   # raw query rows
                    pl.BlockSpec((t, d_pad), lambda i, k: (i, 0)),   # bf16 positive rows
                    pl.BlockSpec((t, d_pad), lambda i, k: (k, 0)),   # bf16 keys (streamed)
                ],
                out_specs=pl.BlockSpec((t, 1), lambda i, k: (i, 0)),
                scratch_shapes=[pltpu.VMEM((t, d_pad), jnp.bfloat16),
                                pltpu.VMEM((t, 1), jnp.float32),
                                pltpu.VMEM((t, 1), jnp.float32),
                                pltpu.VMEM((t, 1), jnp.float32)],
                compiler_params=c_params(),
                cost_estimate=pl.CostEstimate(
                    flops=2 * n_pad * n_pad * d_pad,
                    transcendentals=n_pad * n_pad,
                    bytes_accessed=(6 * n_pad * d_pad
                                    + 2 * (n_pad // t) * n_pad * d_pad
                                    + 4 * n_pad)),
            )(q_pad, p_n, p_n)

        losses = per_sample[:n, 0]
        if self.reduction == "mean":
            return jnp.mean(losses)
        if self.reduction == "sum":
            return jnp.sum(losses)
        return losses


# --------------------------------------------------------------------------
# demo / self-check
# --------------------------------------------------------------------------
def _reference_info_nce(q, p, nk, temperature=0.1):
    def nrm(x):
        return x / jnp.maximum(jnp.linalg.norm(x, axis=-1, keepdims=True), _EPS)
    q, p = nrm(q), nrm(p)
    if nk is not None:
        nk = nrm(nk)
        pos = jnp.sum(q * p, axis=1, keepdims=True)
        logits = jnp.concatenate([pos, q @ nk.T], axis=1) / temperature
        labels = jnp.zeros((q.shape[0],), dtype=jnp.int32)
    else:
        logits = (q @ p.T) / temperature
        labels = jnp.arange(q.shape[0])
    lse = jax.nn.logsumexp(logits, axis=1)
    picked = logits[jnp.arange(q.shape[0]), labels]
    return jnp.mean(lse - picked)


if __name__ == "__main__":
    key = jax.random.PRNGKey(0)
    k_q, k_p, k_n = jax.random.split(key, 3)

    batch_size, num_negative, embedding_size = 8, 16, 32
    query = jax.random.normal(k_q, (batch_size, embedding_size), dtype=jnp.float32)
    positive_key = jax.random.normal(k_p, (batch_size, embedding_size), dtype=jnp.float32)
    negative_keys = jax.random.normal(
        k_n, (num_negative, embedding_size), dtype=jnp.float32)

    loss_fn = InfoNCE(temperature=0.1, reduction="mean", negative_mode="unpaired")

    # main path: explicit unpaired negatives
    loss_with_negatives = loss_fn(query, positive_key, negative_keys)
    jax.block_until_ready(loss_with_negatives)

    # secondary path: negative_keys=None (in-batch negatives)
    loss_in_batch = loss_fn(query, positive_key, None)
    jax.block_until_ready(loss_in_batch)

    ref1 = _reference_info_nce(query, positive_key, negative_keys)
    ref2 = _reference_info_nce(query, positive_key, None)
    ok1 = bool(jnp.allclose(loss_with_negatives, ref1, atol=0.1, rtol=0.1))
    ok2 = bool(jnp.allclose(loss_in_batch, ref2, atol=0.1, rtol=0.1))

    if ok1 and ok2:
        print("KERNEL_OK")
    else:
        print("MISMATCH",
              float(loss_with_negatives), float(ref1),
              float(loss_in_batch), float(ref2))
</pallas_src>

<mosaic_0001>
module attributes {stable_mosaic.version = 11 : i64} {
  func.func @_l2_normalize_kernel(%arg0: i32, %arg1: memref<128x128xf32, #tpu.memory_space<vmem>>, %arg2: memref<128x128xbf16, #tpu.memory_space<vmem>>) attributes {dimension_semantics = [#tpu.dimension_semantics<parallel>], iteration_bounds = array<i64: 1>, scalar_prefetch = 0 : i64, scratch_operands = 0 : i64, tpu.core_type = #tpu.core_type<tc>, window_params = [{transform_indices = @transform_0, window_bounds = array<i64: 128, 128>}, {transform_indices = @transform_1, window_bounds = array<i64: 128, 128>}]} {
    %c0 = arith.constant 0 : index
    %c0_0 = arith.constant 0 : index
    %0 = vector.load %arg1[%c0, %c0_0] : memref<128x128xf32, #tpu.memory_space<vmem>>, vector<128x128xf32>
    %1 = arith.mulf %0, %0 : vector<128x128xf32>
    %cst = arith.constant dense<0.000000e+00> : vector<128xf32>
    %2 = vector.multi_reduction <add>, %1, %cst [1] : vector<128x128xf32> to vector<128xf32>
    %3 = vector.shape_cast %2 : vector<128xf32> to vector<128x1xf32>
    %cst_1 = arith.constant 1.000000e-24 : f32
    %4 = vector.broadcast %cst_1 : f32 to vector<128x1xf32>
    %5 = arith.maximumf %3, %4 : vector<128x1xf32>
    %6 = math.rsqrt %5 : vector<128x1xf32>
    %7 = vector.broadcast %6 : vector<128x1xf32> to vector<128x128xf32>
    %8 = arith.mulf %0, %7 : vector<128x128xf32>
    %9 = arith.truncf %8 : vector<128x128xf32> to vector<128x128xbf16>
    %c0_2 = arith.constant 0 : index
    %c0_3 = arith.constant 0 : index
    %10 = vector.load %arg2[%c0_2, %c0_3] : memref<128x128xbf16, #tpu.memory_space<vmem>>, vector<128x128xbf16>
    tpu.vector_store %arg2[%c0_2, %c0_3], %9 {strides = array<i32>} : memref<128x128xbf16, #tpu.memory_space<vmem>>, vector<128x128xbf16>,
    return
  }
  func.func @transform_0(%arg0: i32) -> (i32, i32) {
    %c0_i32 = arith.constant 0 : i32
    %c0_i32_0 = arith.constant 0 : i32
    return %arg0, %c0_i32 : i32, i32
  }
  func.func @transform_1(%arg0: i32) -> (i32, i32) {
    %c0_i32 = arith.constant 0 : i32
    %c0_i32_0 = arith.constant 0 : i32
    return %arg0, %c0_i32 : i32, i32
  }
}

</mosaic_0001>

<llo_original>
// kernel: tpu_custom_call.1
$region0: #{tpu_custom_call.1}
  #allocation0 [shape = 'u32[]', space=smem, size = 0x4, offset = 0x4, fixed_abs, tag = 'smem constant byte address 0x4 - core index']
  #allocation1 [shape = 'u32[72,128]{1,0:T(1,128)}', space=vmem, size = 0x9000, scoped, tag = 'internal scratch']
  %s0 = inlined_call_operand.hbm [shape: f32[128,128], index: 0, kind: input, shape index: {}]
  %s1 = inlined_call_operand.hbm [shape: bf16[128,128], index: 1, kind: output, shape index: {}]
  %s2 = sld [smem:[#allocation0]]
  $region18: #{tpu_custom_call.1} parent=0
    _
  %s4 = ssub.s32 1, %s2
  %s5 = scalar_select 0, %s4, %s2
  $region1: #{tpu_custom_call.1} parent=0
    #allocation2 [shape = 'u8[65536]{0}', space=vmem, size = 0x10000, scoped, tag = 'input window, operand 0, single buffered']
    #allocation3 [shape = 's32[1]{0}', space=sflag, size = 0x4, scoped, tag = 'scoped memory for tpu_custom_call.1']
    #allocation4 [shape = 's32[1]{0}', space=sflag, size = 0x4, scoped, tag = 'scoped memory for tpu_custom_call.1']
    #allocation5 [shape = 'u8[32768]{0}', space=vmem, size = 0x8000, scoped, tag = 'output window, operand 0, single buffered']
    %6 = vsyncpa [#allocation3], 0
    %7 = vsyncpa [#allocation4], 0
    // Predicated region
    $region2: #{tpu_custom_call.1} parent=1 // pred_check
      _
    $region3: #{tpu_custom_call.1} parent=1 // pred_check_branch
      %9 = sbr.rel (0) target = $region5
    $region4: #{tpu_custom_call.1} parent=1 // pred_region
      %11 = vsyncadd [#allocation3], 0
      %s12 = sshll.u32 %s0, 4
      %s13 = int_to_ptr.hbm [resolvable:$true] %s12
      %s14 = sshll.u32 [#allocation2], 4
      %s15 = int_to_ptr.vmem [resolvable:$true] %s14
      %20 = dma.hbm_to_vmem [thread:$0]  %s13, 2048, %s15, [#allocation3], 128, 128, 8
    $region5: #{tpu_custom_call.1} parent=1 // pred_fallthru
      _
    // Predicated region
    $region6: #{tpu_custom_call.1} parent=1 // pred_check
      _
    $region7: #{tpu_custom_call.1} parent=1 // pred_check_branch
      %22 = sbr.rel (0) target = $region9
    $region8: #{tpu_custom_call.1} parent=1 // pred_region
      %24 = dma.done [#allocation3], 2048
    $region9: #{tpu_custom_call.1} parent=1 // pred_fallthru
      _
    %v25 = vld [vmem:[#allocation2] sm:$0xff]
    %v26 = vld [vmem:[#allocation2 + $0x8] sm:$0xff]
    %v27 = vld [vmem:[#allocation2 + $0x10] sm:$0xff]
    %v28 = vld [vmem:[#allocation2 + $0x18] sm:$0xff]
    %v29 = vld [vmem:[#allocation2 + $0x20] sm:$0xff]
    %v30 = vld [vmem:[#allocation2 + $0x28] sm:$0xff]
    %v31 = vld [vmem:[#allocation2 + $0x30] sm:$0xff]
    %v32 = vld [vmem:[#allocation2 + $0x38] sm:$0xff]
    %v33 = vld [vmem:[#allocation2 + $0x40] sm:$0xff]
    %v34 = vld [vmem:[#allocation2 + $0x48] sm:$0xff]
    %v35 = vld [vmem:[#allocation2 + $0x50] sm:$0xff]
    %v36 = vld [vmem:[#allocation2 + $0x58] sm:$0xff]
    %v37 = vld [vmem:[#allocation2 + $0x60] sm:$0xff]
    %v38 = vld [vmem:[#allocation2 + $0x68] sm:$0xff]
    %v39 = vld [vmem:[#allocation2 + $0x70] sm:$0xff]
    %v40 = vld [vmem:[#allocation2 + $0x78] sm:$0xff]
    %v41 = vmul.f32 %v25, %v25
    %v42 = vmul.f32 %v26, %v26
    %v43 = vmul.f32 %v27, %v27
    %v44 = vmul.f32 %v28, %v28
    %v45 = vmul.f32 %v29, %v29
    %v46 = vmul.f32 %v30, %v30
    %v47 = vmul.f32 %v31, %v31
    %v48 = vmul.f32 %v32, %v32
    %v49 = vmul.f32 %v33, %v33
    %v50 = vmul.f32 %v34, %v34
    %v51 = vmul.f32 %v35, %v35
    %v52 = vmul.f32 %v36, %v36
    %v53 = vmul.f32 %v37, %v37
    %v54 = vmul.f32 %v38, %v38
    %v55 = vmul.f32 %v39, %v39
    %v56 = vmul.f32 %v40, %v40
    %57 = vadd.xlane.f32.xlu0 %v41
    %v58 = vpop.xlane.xlu0 %57
    %59 = vadd.xlane.f32.xlu0 %v42
    %v60 = vpop.xlane.xlu0 %59
    %61 = vadd.xlane.f32.xlu0 %v43
    %v62 = vpop.xlane.xlu0 %61
    %63 = vadd.xlane.f32.xlu0 %v44
    %v64 = vpop.xlane.xlu0 %63
    %65 = vadd.xlane.f32.xlu0 %v45
    %v66 = vpop.xlane.xlu0 %65
    %67 = vadd.xlane.f32.xlu0 %v46
    %v68 = vpop.xlane.xlu0 %67
    %69 = vadd.xlane.f32.xlu0 %v47
    %v70 = vpop.xlane.xlu0 %69
    %71 = vadd.xlane.f32.xlu0 %v48
    %v72 = vpop.xlane.xlu0 %71
    %73 = vadd.xlane.f32.xlu0 %v49
    %v74 = vpop.xlane.xlu0 %73
    %75 = vadd.xlane.f32.xlu0 %v50
    %v76 = vpop.xlane.xlu0 %75
    %77 = vadd.xlane.f32.xlu0 %v51
    %v78 = vpop.xlane.xlu0 %77
    %79 = vadd.xlane.f32.xlu0 %v52
    %v80 = vpop.xlane.xlu0 %79
    %81 = vadd.xlane.f32.xlu0 %v53
    %v82 = vpop.xlane.xlu0 %81
    %83 = vadd.xlane.f32.xlu0 %v54
    %v84 = vpop.xlane.xlu0 %83
    %85 = vadd.xlane.f32.xlu0 %v55
    %v86 = vpop.xlane.xlu0 %85
    %87 = vadd.xlane.f32.xlu0 %v56
    %v88 = vpop.xlane.xlu0 %87
    %v89 = vmax.f32 %v58, 1e-24
    %v90 = vmax.f32 %v60, 1e-24
    %v91 = vmax.f32 %v62, 1e-24
    %v92 = vmax.f32 %v64, 1e-24
    %v93 = vmax.f32 %v66, 1e-24
    %v94 = vmax.f32 %v68, 1e-24
    %v95 = vmax.f32 %v70, 1e-24
    %v96 = vmax.f32 %v72, 1e-24
    %v97 = vmax.f32 %v74, 1e-24
    %v98 = vmax.f32 %v76, 1e-24
    %v99 = vmax.f32 %v78, 1e-24
    %v100 = vmax.f32 %v80, 1e-24
    %v101 = vmax.f32 %v82, 1e-24
    %v102 = vmax.f32 %v84, 1e-24
    %v103 = vmax.f32 %v86, 1e-24
    %v104 = vmax.f32 %v88, 1e-24
    %v105 = vrsqrt.pop %v89
    %v106 = vmul.f32 %v105, %v89
    %v107 = vmul.f32 %v106, %v105
    %v108 = vmul.f32 0.5, %v107
    %v109 = vsub.f32 1.5, %v108
    %v110 = vmul.f32 %v105, %v109
    %vm111 = vweird.f32 %v89
    %vm112 = vweird.f32 %v105
    %vm113 = vmor %vm111, %vm112
    %v114 = vsel %vm113, %v105, %v110
    %v115 = vrsqrt.pop %v90
    %v116 = vmul.f32 %v115, %v90
    %v117 = vmul.f32 %v116, %v115
    %v118 = vmul.f32 0.5, %v117
    %v119 = vsub.f32 1.5, %v118
    %v120 = vmul.f32 %v115, %v119
    %vm121 = vweird.f32 %v90
    %vm122 = vweird.f32 %v115
    %vm123 = vmor %vm121, %vm122
    %v124 = vsel %vm123, %v115, %v120
    %v125 = vrsqrt.pop %v91
    %v126 = vmul.f32 %v125, %v91
    %v127 = vmul.f32 %v126, %v125
    %v128 = vmul.f32 0.5, %v127
    %v129 = vsub.f32 1.5, %v128
    %v130 = vmul.f32 %v125, %v129
    %vm131 = vweird.f32 %v91
    %vm132 = vweird.f32 %v125
    %vm133 = vmor %vm131, %vm132
    %v134 = vsel %vm133, %v125, %v130
    %v135 = vrsqrt.pop %v92
    %v136 = vmul.f32 %v135, %v92
    %v137 = vmul.f32 %v136, %v135
    %v138 = vmul.f32 0.5, %v137
    %v139 = vsub.f32 1.5, %v138
    %v140 = vmul.f32 %v135, %v139
    %vm141 = vweird.f32 %v92
    %vm142 = vweird.f32 %v135
    %vm143 = vmor %vm141, %vm142
    %v144 = vsel %vm143, %v135, %v140
    %v145 = vrsqrt.pop %v93
    %v146 = vmul.f32 %v145, %v93
    %v147 = vmul.f32 %v146, %v145
    %v148 = vmul.f32 0.5, %v147
    %v149 = vsub.f32 1.5, %v148
    %v150 = vmul.f32 %v145, %v149
    %vm151 = vweird.f32 %v93
    %vm152 = vweird.f32 %v145
    %vm153 = vmor %vm151, %vm152
    %v154 = vsel %vm153, %v145, %v150
    %v155 = vrsqrt.pop %v94
    %v156 = vmul.f32 %v155, %v94
    %v157 = vmul.f32 %v156, %v155
    %v158 = vmul.f32 0.5, %v157
    %v159 = vsub.f32 1.5, %v158
    %v160 = vmul.f32 %v155, %v159
    %vm161 = vweird.f32 %v94
    %vm162 = vweird.f32 %v155
    %vm163 = vmor %vm161, %vm162
    %v164 = vsel %vm163, %v155, %v160
    %v165 = vrsqrt.pop %v95
    %v166 = vmul.f32 %v165, %v95
    %v167 = vmul.f32 %v166, %v165
    %v168 = vmul.f32 0.5, %v167
    %v169 = vsub.f32 1.5, %v168
    %v170 = vmul.f32 %v165, %v169
    %vm171 = vweird.f32 %v95
    %vm172 = vweird.f32 %v165
    %vm173 = vmor %vm171, %vm172
    %v174 = vsel %vm173, %v165, %v170
    %v175 = vrsqrt.pop %v96
    %v176 = vmul.f32 %v175, %v96
    %v177 = vmul.f32 %v176, %v175
    %v178 = vmul.f32 0.5, %v177
    %v179 = vsub.f32 1.5, %v178
    %v180 = vmul.f32 %v175, %v179
    %vm181 = vweird.f32 %v96
    %vm182 = vweird.f32 %v175
    %vm183 = vmor %vm181, %vm182
    %v184 = vsel %vm183, %v175, %v180
    %v185 = vrsqrt.pop %v97
    %v186 = vmul.f32 %v185, %v97
    %v187 = vmul.f32 %v186, %v185
    %v188 = vmul.f32 0.5, %v187
    %v189 = vsub.f32 1.5, %v188
    %v190 = vmul.f32 %v185, %v189
    %vm191 = vweird.f32 %v97
    %vm192 = vweird.f32 %v185
    %vm193 = vmor %vm191, %vm192
    %v194 = vsel %vm193, %v185, %v190
    %v195 = vrsqrt.pop %v98
    %v196 = vmul.f32 %v195, %v98
    %v197 = vmul.f32 %v196, %v195
    %v198 = vmul.f32 0.5, %v197
    %v199 = vsub.f32 1.5, %v198
    %v200 = vmul.f32 %v195, %v199
    %vm201 = vweird.f32 %v98
    %vm202 = vweird.f32 %v195
    %vm203 = vmor %vm201, %vm202
    %v204 = vsel %vm203, %v195, %v200
    %v205 = vrsqrt.pop %v99
    %v206 = vmul.f32 %v205, %v99
    %v207 = vmul.f32 %v206, %v205
    %v208 = vmul.f32 0.5, %v207
    %v209 = vsub.f32 1.5, %v208
    %v210 = vmul.f32 %v205, %v209
    %vm211 = vweird.f32 %v99
    %vm212 = vweird.f32 %v205
    %vm213 = vmor %vm211, %vm212
    %v214 = vsel %vm213, %v205, %v210
    %v215 = vrsqrt.pop %v100
    %v216 = vmul.f32 %v215, %v100
    %v217 = vmul.f32 %v216, %v215
    %v218 = vmul.f32 0.5, %v217
    %v219 = vsub.f32 1.5, %v218
    %v220 = vmul.f32 %v215, %v219
    %vm221 = vweird.f32 %v100
    %vm222 = vweird.f32 %v215
    %vm223 = vmor %vm221, %vm222
    %v224 = vsel %vm223, %v215, %v220
    %v225 = vrsqrt.pop %v101
    %v226 = vmul.f32 %v225, %v101
    %v227 = vmul.f32 %v226, %v225
    %v228 = vmul.f32 0.5, %v227
    %v229 = vsub.f32 1.5, %v228
    %v230 = vmul.f32 %v225, %v229
    %vm231 = vweird.f32 %v101
    %vm232 = vweird.f32 %v225
    %vm233 = vmor %vm231, %vm232
    %v234 = vsel %vm233, %v225, %v230
    %v235 = vrsqrt.pop %v102
    %v236 = vmul.f32 %v235, %v102
    %v237 = vmul.f32 %v236, %v235
    %v238 = vmul.f32 0.5, %v237
    %v239 = vsub.f32 1.5, %v238
    %v240 = vmul.f32 %v235, %v239
    %vm241 = vweird.f32 %v102
    %vm242 = vweird.f32 %v235
    %vm243 = vmor %vm241, %vm242
    %v244 = vsel %vm243, %v235, %v240
    %v245 = vrsqrt.pop %v103
    %v246 = vmul.f32 %v245, %v103
    %v247 = vmul.f32 %v246, %v245
    %v248 = vmul.f32 0.5, %v247
    %v249 = vsub.f32 1.5, %v248
    %v250 = vmul.f32 %v245, %v249
    %vm251 = vweird.f32 %v103
    %vm252 = vweird.f32 %v245
    %vm253 = vmor %vm251, %vm252
    %v254 = vsel %vm253, %v245, %v250
    %v255 = vrsqrt.pop %v104
    %v256 = vmul.f32 %v255, %v104
    %v257 = vmul.f32 %v256, %v255
    %v258 = vmul.f32 0.5, %v257
    %v259 = vsub.f32 1.5, %v258
    %v260 = vmul.f32 %v255, %v259
    %vm261 = vweird.f32 %v104
    %vm262 = vweird.f32 %v255
    %vm263 = vmor %vm261, %vm262
    %v264 = vsel %vm263, %v255, %v260
    %v265 = vmul.f32 %v25, %v114
    %v266 = vmul.f32 %v26, %v124
    %v267 = vmul.f32 %v27, %v134
    %v268 = vmul.f32 %v28, %v144
    %v269 = vmul.f32 %v29, %v154
    %v270 = vmul.f32 %v30, %v164
    %v271 = vmul.f32 %v31, %v174
    %v272 = vmul.f32 %v32, %v184
    %v273 = vmul.f32 %v33, %v194
    %v274 = vmul.f32 %v34, %v204
    %v275 = vmul.f32 %v35, %v214
    %v276 = vmul.f32 %v36, %v224
    %v277 = vmul.f32 %v37, %v234
    %v278 = vmul.f32 %v38, %v244
    %v279 = vmul.f32 %v39, %v254
    %v280 = vmul.f32 %v40, %v264
    %v281 = vpack.c.bf16 %v265, %v265
    %v282 = vpack.c.bf16 %v266, %v266
    %v283 = vpack.c.bf16 %v267, %v267
    %v284 = vpack.c.bf16 %v268, %v268
    %v285 = vpack.c.bf16 %v269, %v269
    %v286 = vpack.c.bf16 %v270, %v270
    %v287 = vpack.c.bf16 %v271, %v271
    %v288 = vpack.c.bf16 %v272, %v272
    %v289 = vpack.c.bf16 %v273, %v273
    %v290 = vpack.c.bf16 %v274, %v274
    %v291 = vpack.c.bf16 %v275, %v275
    %v292 = vpack.c.bf16 %v276, %v276
    %v293 = vpack.c.bf16 %v277, %v277
    %v294 = vpack.c.bf16 %v278, %v278
    %v295 = vpack.c.bf16 %v279, %v279
    %v296 = vpack.c.bf16 %v280, %v280
    %297 = vst [vmem:[#allocation5] sm:$0xf] %v281
    %298 = vst [vmem:[#allocation5 + $0x4] sm:$0xf] %v282
    %299 = vst [vmem:[#allocation5 + $0x8] sm:$0xf] %v283
    %300 = vst [vmem:[#allocation5 + $0xc] sm:$0xf] %v284
    %301 = vst [vmem:[#allocation5 + $0x10] sm:$0xf] %v285
    %302 = vst [vmem:[#allocation5 + $0x14] sm:$0xf] %v286
    %303 = vst [vmem:[#allocation5 + $0x18] sm:$0xf] %v287
    %304 = vst [vmem:[#allocation5 + $0x1c] sm:$0xf] %v288
    %305 = vst [vmem:[#allocation5 + $0x20] sm:$0xf] %v289
    %306 = vst [vmem:[#allocation5 + $0x24] sm:$0xf] %v290
    %307 = vst [vmem:[#allocation5 + $0x28] sm:$0xf] %v291
    %308 = vst [vmem:[#allocation5 + $0x2c] sm:$0xf] %v292
    %309 = vst [vmem:[#allocation5 + $0x30] sm:$0xf] %v293
    %310 = vst [vmem:[#allocation5 + $0x34] sm:$0xf] %v294
    %311 = vst [vmem:[#allocation5 + $0x38] sm:$0xf] %v295
    %312 = vst [vmem:[#allocation5 + $0x3c] sm:$0xf] %v296
    // Predicated region
    $region10: #{tpu_custom_call.1} parent=1 // pred_check
      _
    $region11: #{tpu_custom_call.1} parent=1 // pred_check_branch
      %314 = sbr.rel (0) target = $region13
    $region12: #{tpu_custom_call.1} parent=1 // pred_region
      %316 = vsyncadd [#allocation4], 0
      %s317 = sshll.u32 [#allocation5], 4
      %s318 = int_to_ptr.vmem [resolvable:$true] %s317
      %s319 = sshll.u32 %s1, 4
      %s320 = int_to_ptr.hbm [resolvable:$true] %s319
      %325 = dma.vmem_to_hbm [thread:$0]  %s318, 1024, %s320, [#allocation4], 64, 64, 4
    $region13: #{tpu_custom_call.1} parent=1 // pred_fallthru
      _
    // Predicated region
    $region14: #{tpu_custom_call.1} parent=1 // pred_check
      _
    $region15: #{tpu_custom_call.1} parent=1 // pred_check_branch
      %327 = sbr.rel (0) target = $region17
    $region16: #{tpu_custom_call.1} parent=1 // pred_region
      %329 = dma.done [#allocation4], 1024
    $region17: #{tpu_custom_call.1} parent=1 // pred_fallthru
      _
    %330 = vsyncpa [#allocation3], 1
    %331 = vsyncpa [#allocation4], 1

</llo_original>
